<compile_context>
chip_gen: v7x
topology: tpu7x:2x2x1
jax: 0.10.0
libtpu: 0.0.40
codegen_flags: <defaults>
</compile_context>

<pallas_src>
import jax
import jax.numpy as jnp
from jax import lax
from jax.experimental import pallas as pl
from jax.experimental.pallas import tpu as pltpu

LANES = 128
SUBLANES = 8


def _sublane_multiple(dtype):
    """Minimum sublane multiple for a packed dtype: f32->8, bf16->16, int8->32."""
    return SUBLANES * (4 // jnp.dtype(dtype).itemsize)


def _default_num_slices():
    """2 slices (one per TensorCore) on v7x-class chips, 1 on v5e/v6e."""
    try:
        kind = jax.devices()[0].device_kind.lower()
    except Exception:
        return 1
    return 2 if ("v7" in kind or "7x" in kind) else 1


def _make_dice_kernel(*, total_rows, tile_rows, group_rows, steps_per_slice,
                      needs_mask, unroll=8):
    """Build the kernel body, closing over static geometry."""
    full_blocks = total_rows // tile_rows        # blocks with no OOB rows
    groups = tile_rows // group_rows             # fori_loop trip count
    subgroups = group_rows // SUBLANES

    def kernel(x_ref, t_ref, o_ref):
        c = pl.program_id(0)                     # parallel (core) slice
        i = pl.program_id(1)                     # streaming step in slice
        block_idx = c * steps_per_slice + i

        # The output block index is constant along the inner axis, so o_ref is
        # VMEM-resident across the whole slice: accumulate directly into it.
        @pl.when(i == 0)
        def _():
            o_ref[...] = jnp.zeros_like(o_ref)

        def fold(v):
            # (group_rows, LANES) f32 -> (8, 128): pure VPU adds.
            if subgroups == 1:
                return v
            return jnp.sum(v.reshape(subgroups, SUBLANES, LANES), axis=0)

        def load_group(ref, start):
            # Cast AFTER the (tiny, aligned) ref slice — no full-tile f32 temp.
            return ref[pl.ds(start, group_rows), :].astype(jnp.float32)

        def body(g, carry):
            inter, xs, ts = carry
            start = pl.multiple_of(g * group_rows, group_rows)
            xg = load_group(x_ref, start)
            tg = load_group(t_ref, start)
            return (inter + fold(xg * tg), xs + fold(xg), ts + fold(tg))

        def body_masked(g, carry):
            # Only edge blocks run this; the mask is per-group (group_rows,128),
            # never a full-tile iota/where.
            inter, xs, ts = carry
            start = pl.multiple_of(g * group_rows, group_rows)
            xg = load_group(x_ref, start)
            tg = load_group(t_ref, start)
            row = (lax.broadcasted_iota(jnp.int32, (group_rows, LANES), 0)
                   + block_idx * tile_rows + start)
            valid = row < total_rows
            xg = jnp.where(valid, xg, 0.0)
            tg = jnp.where(valid, tg, 0.0)
            return (inter + fold(xg * tg), xs + fold(xg), ts + fold(tg))

        zero = jnp.zeros((SUBLANES, LANES), jnp.float32)
        init = (zero, zero, zero)

        def accumulate(body_fn):
            inter, xs, ts = lax.fori_loop(0, groups, body_fn, init,
                                          unroll=min(unroll, groups))
            o_ref[0, 0] += inter
            o_ref[0, 1] += xs
            o_ref[0, 2] += ts

        if not needs_mask:
            accumulate(body)
        else:
            is_edge = block_idx >= full_blocks

            @pl.when(jnp.logical_not(is_edge))
            def _():
                accumulate(body)

            @pl.when(is_edge)
            def _():
                accumulate(body_masked)

    return kernel


def dice_loss(inputs, targets, smooth=1.0, *, tile_rows=8192, num_slices=None):
    """Pallas implementation of DiceLoss.forward (returns a scalar)."""
    assert inputs.shape == targets.shape

    def _prep(a):
        a = a.reshape(-1)
        dt = a.dtype
        if jnp.issubdtype(dt, jnp.floating):
            if dt == jnp.float64:
                a = a.astype(jnp.float32)      # f64 refs unsupported on TPU
        elif dt == jnp.bool_:
            a = a.astype(jnp.int8)             # 1-byte stream for binary targets
        elif jnp.dtype(dt).itemsize > 1:
            a = a.astype(jnp.float32)          # wide ints: keep exact, 4 B stream
        return a                                # int8/uint8 stream natively

    x = _prep(inputs)
    t = _prep(targets)
    n = x.shape[0]

    # Pad (with zeros) only when the flat length is not a multiple of 128 lanes;
    # the ragged row tail is otherwise handled by in-kernel masking.
    pad = (-n) % LANES
    if pad:
        x = jnp.pad(x, (0, pad))
        t = jnp.pad(t, (0, pad))
    rows = (n + pad) // LANES

    # Group size respects the packed-dtype sublane multiples of BOTH streams.
    group_rows = max(_sublane_multiple(x.dtype), _sublane_multiple(t.dtype))

    # Tile geometry: multiple of group_rows, no larger than the rounded-up row
    # count, and capped so the double-buffered input DMA stays well inside the
    # v7x 64 MiB VMEM (and inside the raised scoped limits on v5e/v6e).
    bytes_per_row = LANES * (x.dtype.itemsize + t.dtype.itemsize)
    vmem_rows_cap = (40 << 20) // (2 * bytes_per_row)
    tile_rows = max(group_rows,
                    (min(tile_rows, vmem_rows_cap) // group_rows) * group_rows)
    rows_up = ((rows + group_rows - 1) // group_rows) * group_rows
    tile_rows = min(tile_rows, rows_up)

    num_blocks = pl.cdiv(rows, tile_rows)
    if num_slices is None:
        num_slices = _default_num_slices()
    num_slices = max(1, min(num_slices, num_blocks))
    steps_per_slice = pl.cdiv(num_blocks, num_slices)
    needs_mask = (num_slices * steps_per_slice * tile_rows) != rows

    x2 = x.reshape(rows, LANES)
    t2 = t.reshape(rows, LANES)

    def in_index_map(c, i):
        # Clamp fully out-of-range blocks onto the last real block; the kernel
        # masks their contribution to zero.
        return (jnp.minimum(c * steps_per_slice + i, num_blocks - 1), 0)

    kernel = _make_dice_kernel(
        total_rows=rows,
        tile_rows=tile_rows,
        group_rows=group_rows,
        steps_per_slice=steps_per_slice,
        needs_mask=needs_mask,
    )

    # Explicit VMEM budget: double-buffered inputs + slack, floored at 16 MiB,
    # capped at 48 MiB (safe on v7x's 64 MiB physical VMEM).
    in_tile_bytes = tile_rows * bytes_per_row
    vmem_limit = int(min(max(2 * in_tile_bytes + (4 << 20), 16 << 20), 48 << 20))

    partials = pl.pallas_call(
        kernel,
        out_shape=jax.ShapeDtypeStruct(
            (num_slices, 3, SUBLANES, LANES), jnp.float32
        ),
        grid_spec=pltpu.PrefetchScalarGridSpec(
            num_scalar_prefetch=0,
            grid=(num_slices, steps_per_slice),
            in_specs=[
                pl.BlockSpec((tile_rows, LANES), in_index_map),
                pl.BlockSpec((tile_rows, LANES), in_index_map),
            ],
            out_specs=pl.BlockSpec(
                (1, 3, SUBLANES, LANES), lambda c, i: (c, 0, 0, 0)
            ),
        ),
        compiler_params=pltpu.CompilerParams(
            dimension_semantics=("parallel", "arbitrary"),
            vmem_limit_bytes=vmem_limit,
        ),
        cost_estimate=pl.CostEstimate(
            flops=4 * rows * LANES,
            transcendentals=0,
            bytes_accessed=int(x2.size * x2.dtype.itemsize
                               + t2.size * t2.dtype.itemsize),
        ),
    )(x2, t2)

    # Final (tiny) cross-lane / cross-slice reduction + the dice formula.
    sums = jnp.sum(partials, axis=(0, 2, 3))           # (3,)
    intersection, xsum, tsum = sums[0], sums[1], sums[2]
    dice = (2.0 * intersection + smooth) / (xsum + tsum + smooth)
    return 1.0 - dice


def dice_loss_ref(inputs, targets, smooth=1.0):
    x = inputs.reshape(-1).astype(jnp.float32)
    t = targets.reshape(-1).astype(jnp.float32)
    intersection = jnp.sum(x * t)
    dice = (2.0 * intersection + smooth) / (jnp.sum(x) + jnp.sum(t) + smooth)
    return 1.0 - dice


if __name__ == "__main__":
    key = jax.random.PRNGKey(0)
    k1, k2 = jax.random.split(key)

    # Small shapes consistent with a segmentation setting: (N, C, H, W).
    shape = (2, 4, 16, 16)
    inputs = jax.nn.sigmoid(jax.random.normal(k1, shape, dtype=jnp.float32))
    targets = (jax.random.uniform(k2, shape) > 0.5).astype(jnp.float32)

    out = jax.block_until_ready(dice_loss(inputs, targets))
    ref = dice_loss_ref(inputs, targets)
    assert jnp.allclose(out, ref, atol=1e-5, rtol=1e-5), (out, ref)

    # Non-default smooth must be honored.
    out2 = jax.block_until_ready(dice_loss(inputs, targets, smooth=2.0))
    ref2 = dice_loss_ref(inputs, targets, smooth=2.0)
    assert jnp.allclose(out2, ref2, atol=1e-5, rtol=1e-5), (out2, ref2)

    # Bool targets stream as int8 (1 B/elem) + ragged-tail masking path.
    shape_r = (2, 3, 7, 11)
    k3, k4 = jax.random.split(k2)
    inputs_r = jax.nn.sigmoid(jax.random.normal(k3, shape_r, dtype=jnp.float32))
    targets_b = jax.random.uniform(k4, shape_r) > 0.5
    out3 = jax.block_until_ready(dice_loss(inputs_r, targets_b))
    ref3 = dice_loss_ref(inputs_r, targets_b.astype(jnp.float32))
    assert jnp.allclose(out3, ref3, atol=1e-5, rtol=1e-5), (out3, ref3)

    print("KERNEL_OK")
</pallas_src>

<mosaic_0001>
module attributes {stable_mosaic.version = 11 : i64} {
  func.func @kernel(%arg0: i32, %arg1: i32, %arg2: memref<16x128xf32, #tpu.memory_space<vmem>>, %arg3: memref<16x128xf32, #tpu.memory_space<vmem>>, %arg4: memref<1x3x8x128xf32, #tpu.memory_space<vmem>>) attributes {dimension_semantics = [#tpu.dimension_semantics<parallel>, #tpu.dimension_semantics<arbitrary>], iteration_bounds = array<i64: 1, 1>, scalar_prefetch = 0 : i64, scratch_operands = 0 : i64, tpu.core_type = #tpu.core_type<tc>, window_params = [{transform_indices = @transform_0, window_bounds = array<i64: 16, 128>}, {transform_indices = @transform_1, window_bounds = array<i64: 16, 128>}, {transform_indices = @transform_2, window_bounds = array<i64: 1, 3, 8, 128>}]} {
    %c0_i32 = arith.constant 0 : i32
    %0 = arith.cmpi eq, %arg1, %c0_i32 : i32
    %1 = arith.extui %0 : i1 to i32
    %c0_i32_0 = arith.constant 0 : i32
    %2 = arith.cmpi ne, %1, %c0_i32_0 : i32
    scf.if %2 {
      %cst_28 = arith.constant 0.000000e+00 : f32
      %42 = vector.broadcast %cst_28 : f32 to vector<1x3x8x128xf32>
      %c0_29 = arith.constant 0 : index
      %c0_30 = arith.constant 0 : index
      %c0_31 = arith.constant 0 : index
      %c0_32 = arith.constant 0 : index
      %43 = vector.load %arg4[%c0_29, %c0_30, %c0_31, %c0_32] : memref<1x3x8x128xf32, #tpu.memory_space<vmem>>, vector<1x3x8x128xf32>
      tpu.vector_store %arg4[%c0_29, %c0_30, %c0_31, %c0_32], %42 {strides = array<i32>} : memref<1x3x8x128xf32, #tpu.memory_space<vmem>>, vector<1x3x8x128xf32>,
    } else {
    }
    %cst = arith.constant 0.000000e+00 : f32
    %3 = vector.broadcast %cst : f32 to vector<8x128xf32>
    %c0_i32_1 = arith.constant 0 : i32
    %c8_i32 = arith.constant 8 : i32
    %4 = arith.muli %c0_i32_1, %c8_i32 : i32
    %5 = tpu.assume_multiple %4, 8 : i32
    %6 = arith.index_cast %5 : i32 to index
    %c0 = arith.constant 0 : index
    %7 = vector.load %arg2[%6, %c0] : memref<16x128xf32, #tpu.memory_space<vmem>>, vector<8x128xf32>
    %8 = arith.index_cast %5 : i32 to index
    %c0_2 = arith.constant 0 : index
    %9 = vector.load %arg3[%8, %c0_2] : memref<16x128xf32, #tpu.memory_space<vmem>>, vector<8x128xf32>
    %10 = arith.mulf %7, %9 : vector<8x128xf32>
    %11 = arith.addf %3, %10 : vector<8x128xf32>
    %12 = arith.addf %3, %7 : vector<8x128xf32>
    %13 = arith.addf %3, %9 : vector<8x128xf32>
    %c1_i32 = arith.constant 1 : i32
    %c8_i32_3 = arith.constant 8 : i32
    %14 = arith.muli %c1_i32, %c8_i32_3 : i32
    %15 = tpu.assume_multiple %14, 8 : i32
    %16 = arith.index_cast %15 : i32 to index
    %c0_4 = arith.constant 0 : index
    %17 = vector.load %arg2[%16, %c0_4] : memref<16x128xf32, #tpu.memory_space<vmem>>, vector<8x128xf32>
    %18 = arith.index_cast %15 : i32 to index
    %c0_5 = arith.constant 0 : index
    %19 = vector.load %arg3[%18, %c0_5] : memref<16x128xf32, #tpu.memory_space<vmem>>, vector<8x128xf32>
    %20 = arith.mulf %17, %19 : vector<8x128xf32>
    %21 = arith.addf %11, %20 : vector<8x128xf32>
    %22 = arith.addf %12, %17 : vector<8x128xf32>
    %23 = arith.addf %13, %19 : vector<8x128xf32>
    %c2_i32 = arith.constant 2 : i32
    %c0_6 = arith.constant 0 : index
    %c0_7 = arith.constant 0 : index
    %c0_8 = arith.constant 0 : index
    %c0_9 = arith.constant 0 : index
    %24 = vector.load %arg4[%c0_6, %c0_7, %c0_8, %c0_9] : memref<1x3x8x128xf32, #tpu.memory_space<vmem>>, vector<1x1x8x128xf32>
    %25 = vector.shape_cast %24 : vector<1x1x8x128xf32> to vector<8x128xf32>
    %26 = arith.addf %25, %21 : vector<8x128xf32>
    %c0_10 = arith.constant 0 : index
    %c0_11 = arith.constant 0 : index
    %c0_12 = arith.constant 0 : index
    %c0_13 = arith.constant 0 : index
    %27 = vector.load %arg4[%c0_10, %c0_11, %c0_12, %c0_13] : memref<1x3x8x128xf32, #tpu.memory_space<vmem>>, vector<1x1x8x128xf32>
    %28 = vector.shape_cast %27 : vector<1x1x8x128xf32> to vector<8x128xf32>
    %29 = vector.shape_cast %26 : vector<8x128xf32> to vector<1x1x8x128xf32>
    tpu.vector_store %arg4[%c0_10, %c0_11, %c0_12, %c0_13], %29 {strides = array<i32>} : memref<1x3x8x128xf32, #tpu.memory_space<vmem>>, vector<1x1x8x128xf32>,
    %c0_14 = arith.constant 0 : index
    %c1 = arith.constant 1 : index
    %c0_15 = arith.constant 0 : index
    %c0_16 = arith.constant 0 : index
    %30 = vector.load %arg4[%c0_14, %c1, %c0_15, %c0_16] : memref<1x3x8x128xf32, #tpu.memory_space<vmem>>, vector<1x1x8x128xf32>
    %31 = vector.shape_cast %30 : vector<1x1x8x128xf32> to vector<8x128xf32>
    %32 = arith.addf %31, %22 : vector<8x128xf32>
    %c0_17 = arith.constant 0 : index
    %c1_18 = arith.constant 1 : index
    %c0_19 = arith.constant 0 : index
    %c0_20 = arith.constant 0 : index
    %33 = vector.load %arg4[%c0_17, %c1_18, %c0_19, %c0_20] : memref<1x3x8x128xf32, #tpu.memory_space<vmem>>, vector<1x1x8x128xf32>
    %34 = vector.shape_cast %33 : vector<1x1x8x128xf32> to vector<8x128xf32>
    %35 = vector.shape_cast %32 : vector<8x128xf32> to vector<1x1x8x128xf32>
    tpu.vector_store %arg4[%c0_17, %c1_18, %c0_19, %c0_20], %35 {strides = array<i32>} : memref<1x3x8x128xf32, #tpu.memory_space<vmem>>, vector<1x1x8x128xf32>,
    %c0_21 = arith.constant 0 : index
    %c2 = arith.constant 2 : index
    %c0_22 = arith.constant 0 : index
    %c0_23 = arith.constant 0 : index
    %36 = vector.load %arg4[%c0_21, %c2, %c0_22, %c0_23] : memref<1x3x8x128xf32, #tpu.memory_space<vmem>>, vector<1x1x8x128xf32>
    %37 = vector.shape_cast %36 : vector<1x1x8x128xf32> to vector<8x128xf32>
    %38 = arith.addf %37, %23 : vector<8x128xf32>
    %c0_24 = arith.constant 0 : index
    %c2_25 = arith.constant 2 : index
    %c0_26 = arith.constant 0 : index
    %c0_27 = arith.constant 0 : index
    %39 = vector.load %arg4[%c0_24, %c2_25, %c0_26, %c0_27] : memref<1x3x8x128xf32, #tpu.memory_space<vmem>>, vector<1x1x8x128xf32>
    %40 = vector.shape_cast %39 : vector<1x1x8x128xf32> to vector<8x128xf32>
    %41 = vector.shape_cast %38 : vector<8x128xf32> to vector<1x1x8x128xf32>
    tpu.vector_store %arg4[%c0_24, %c2_25, %c0_26, %c0_27], %41 {strides = array<i32>} : memref<1x3x8x128xf32, #tpu.memory_space<vmem>>, vector<1x1x8x128xf32>,
    return
  }
  func.func @transform_0(%arg0: i32, %arg1: i32) -> (i32, i32) {
    %c1_i32 = arith.constant 1 : i32
    %0 = arith.muli %arg0, %c1_i32 : i32
    %1 = arith.addi %0, %arg1 : i32
    %c0_i32 = arith.constant 0 : i32
    %2 = arith.minsi %1, %c0_i32 : i32
    %c0_i32_0 = arith.constant 0 : i32
    %c0_i32_1 = arith.constant 0 : i32
    return %2, %c0_i32_0 : i32, i32
  }
  func.func @transform_1(%arg0: i32, %arg1: i32) -> (i32, i32) {
    %c1_i32 = arith.constant 1 : i32
    %0 = arith.muli %arg0, %c1_i32 : i32
    %1 = arith.addi %0, %arg1 : i32
    %c0_i32 = arith.constant 0 : i32
    %2 = arith.minsi %1, %c0_i32 : i32
    %c0_i32_0 = arith.constant 0 : i32
    %c0_i32_1 = arith.constant 0 : i32
    return %2, %c0_i32_0 : i32, i32
  }
  func.func @transform_2(%arg0: i32, %arg1: i32) -> (i32, i32, i32, i32) {
    %c0_i32 = arith.constant 0 : i32
    %c0_i32_0 = arith.constant 0 : i32
    %c0_i32_1 = arith.constant 0 : i32
    %c0_i32_2 = arith.constant 0 : i32
    return %arg0, %c0_i32, %c0_i32_0, %c0_i32_1 : i32, i32, i32, i32
  }
}

</mosaic_0001>

<llo_original>
// kernel: tpu_custom_call.1
$region0: #{tpu_custom_call.1}
  #allocation0 [shape = 'u32[]', space=smem, size = 0x4, offset = 0x4, fixed_abs, tag = 'smem constant byte address 0x4 - core index']
  #allocation1 [shape = 'u32[144,128]{1,0:T(1,128)}', space=vmem, size = 0x12000, scoped, tag = 'internal scratch']
  %s0 = inlined_call_operand.hbm [shape: f32[16,128], index: 0, kind: input, shape index: {}]
  %s1 = inlined_call_operand.hbm [shape: f32[16,128], index: 1, kind: input, shape index: {}]
  %s2 = inlined_call_operand.hbm [shape: f32[1,3,8,128], index: 2, kind: output, shape index: {}]
  %s3 = sld [smem:[#allocation0]]
  $region30: #{tpu_custom_call.1} parent=0
    _
  %s5 = ssub.s32 1, %s3
  %s6 = scalar_select 0, %s5, %s3
  $region1: #{tpu_custom_call.1} parent=0
    #allocation2 [shape = 'u8[8192]{0}', space=vmem, size = 0x2000, scoped, tag = 'input window, operand 0, single buffered']
    #allocation3 [shape = 's32[1]{0}', space=sflag, size = 0x4, scoped, tag = 'scoped memory for tpu_custom_call.1']
    #allocation4 [shape = 's32[1]{0}', space=sflag, size = 0x4, scoped, tag = 'scoped memory for tpu_custom_call.1']
    #allocation5 [shape = 'u8[8192]{0}', space=vmem, size = 0x2000, scoped, tag = 'input window, operand 1, single buffered']
    #allocation6 [shape = 's32[1]{0}', space=sflag, size = 0x4, scoped, tag = 'scoped memory for tpu_custom_call.1']
    #allocation7 [shape = 'u8[12288]{0}', space=vmem, size = 0x3000, scoped, tag = 'output window, operand 0, single buffered']
    %7 = vsyncpa [#allocation3], 0
    %8 = vsyncpa [#allocation6], 0
    %9 = vsyncpa [#allocation4], 0
    // Predicated region
    $region2: #{tpu_custom_call.1} parent=1 // pred_check
      _
    $region3: #{tpu_custom_call.1} parent=1 // pred_check_branch
      %11 = sbr.rel (0) target = $region5
    $region4: #{tpu_custom_call.1} parent=1 // pred_region
      %s12 = sadd.s32 0, 0
      %p13 = scmp.lt.s32.totalorder %s12, 0
      %s14 = scalar_select %p13, %s12, 0
      %s15 = smul.u32 2, %s14
      %s17 = ssub.s32 256, 256
      %18 = vsyncadd [#allocation3], %s17
      %s19 = smul.addr %s15, 128
      %s20 = scalar_lea.hbm %s0, %s19
      %s21 = sshll.u32 [#allocation2], 4
      %s22 = int_to_ptr.vmem [resolvable:$true] %s21
      %27 = dma.hbm_to_vmem [thread:$0]  %s20, 256, %s22, [#allocation3], 128, 128, 8
    $region5: #{tpu_custom_call.1} parent=1 // pred_fallthru
      _
    // Predicated region
    $region6: #{tpu_custom_call.1} parent=1 // pred_check
      _
    $region7: #{tpu_custom_call.1} parent=1 // pred_check_branch
      %29 = sbr.rel (0) target = $region9
    $region8: #{tpu_custom_call.1} parent=1 // pred_region
      %s30 = sadd.s32 0, 0
      %p31 = scmp.lt.s32.totalorder %s30, 0
      %s32 = scalar_select %p31, %s30, 0
      %s33 = smul.u32 2, %s32
      %s35 = ssub.s32 256, 256
      %36 = vsyncadd [#allocation6], %s35
      %s37 = smul.addr %s33, 128
      %s38 = scalar_lea.hbm %s1, %s37
      %s39 = sshll.u32 [#allocation5], 4
      %s40 = int_to_ptr.vmem [resolvable:$true] %s39
      %45 = dma.hbm_to_vmem [thread:$0]  %s38, 256, %s40, [#allocation6], 128, 128, 8
    $region9: #{tpu_custom_call.1} parent=1 // pred_fallthru
      _
    // Predicated region
    $region10: #{tpu_custom_call.1} parent=1 // pred_check
      _
    $region11: #{tpu_custom_call.1} parent=1 // pred_check_branch
      %47 = sbr.rel (0) target = $region13
    $region12: #{tpu_custom_call.1} parent=1 // pred_region
      %48 = dma.done [#allocation3], 256
    $region13: #{tpu_custom_call.1} parent=1 // pred_fallthru
      _
    // Predicated region
    $region14: #{tpu_custom_call.1} parent=1 // pred_check
      _
    $region15: #{tpu_custom_call.1} parent=1 // pred_check_branch
      %50 = sbr.rel (0) target = $region17
    $region16: #{tpu_custom_call.1} parent=1 // pred_region
      %51 = dma.done [#allocation6], 256
    $region17: #{tpu_custom_call.1} parent=1 // pred_fallthru
      _
    %s52 = sadd.s32 0, 0
    %p53 = scmp.lt.s32.totalorder %s52, 0
    %s54 = scalar_select %p53, %s52, 0
    %s55 = smul.u32 2, %s54
    %s56 = sadd.s32 0, 0
    %p57 = scmp.lt.s32.totalorder %s56, 0
    %s58 = scalar_select %p57, %s56, 0
    %s59 = smul.u32 2, %s58
    %p60 = scmp.eq.s32.totalorder 0, 0
    // Predicated region
    $region18: #{tpu_custom_call.1} parent=1 // pred_check
      %p61 = pneg %p60
    $region19: #{tpu_custom_call.1} parent=1 // pred_check_branch
      %63 = sbr.rel (%p61) target = $region21
    $region20: #{tpu_custom_call.1} parent=1 // pred_region
      %64 = vst [vmem:[#allocation7] sm:$0xff] 0.0
      %65 = vst [vmem:[#allocation7 + $0x8] sm:$0xff] 0.0
      %66 = vst [vmem:[#allocation7 + $0x10] sm:$0xff] 0.0
    $region21: #{tpu_custom_call.1} parent=1 // pred_fallthru
      _
    %v67 = vld [vmem:[#allocation2] sm:$0xff]
    %v68 = vld [vmem:[#allocation5] sm:$0xff]
    %v69 = vmul.f32 %v67, %v68
    %v70 = vadd.f32 %v69, 0.0
    %v71 = vadd.f32 %v67, 0.0
    %v72 = vadd.f32 %v68, 0.0
    %s73 = scalar_lea.vmem [#allocation2], 8
    %v74 = vld [vmem:[%s73] sm:$0xff]
    %s75 = scalar_lea.vmem [#allocation5], 8
    %v76 = vld [vmem:[%s75] sm:$0xff]
    %v77 = vmul.f32 %v74, %v76
    %v78 = vadd.f32 %v70, %v77
    %v79 = vadd.f32 %v71, %v74
    %v80 = vadd.f32 %v72, %v76
    %v81 = vld [vmem:[#allocation7] sm:$0xff]
    %v82 = vadd.f32 %v81, %v78
    %83 = vst [vmem:[#allocation7] sm:$0xff] %v82
    %s84 = scalar_lea.vmem [#allocation7], 8
    %v85 = vld [vmem:[%s84] sm:$0xff]
    %v86 = vadd.f32 %v85, %v79
    %87 = vst [vmem:[%s84] sm:$0xff] %v86
    %s88 = scalar_lea.vmem [#allocation7], 16
    %v89 = vld [vmem:[%s88] sm:$0xff]
    %v90 = vadd.f32 %v89, %v80
    %91 = vst [vmem:[%s88] sm:$0xff] %v90
    // Predicated region
    $region22: #{tpu_custom_call.1} parent=1 // pred_check
      _
    $region23: #{tpu_custom_call.1} parent=1 // pred_check_branch
      %93 = sbr.rel (0) target = $region25
    $region24: #{tpu_custom_call.1} parent=1 // pred_region
      %s95 = ssub.s32 384, 384
      %96 = vsyncadd [#allocation4], %s95
      %s97 = sshll.u32 [#allocation7], 4
      %s98 = int_to_ptr.vmem [resolvable:$true] %s97
      %103 = dma.vmem_to_hbm [thread:$0]  %s98, 384, %s2, [#allocation4], 128, 128, 8
    $region25: #{tpu_custom_call.1} parent=1 // pred_fallthru
      _
    // Predicated region
    $region26: #{tpu_custom_call.1} parent=1 // pred_check
      _
    $region27: #{tpu_custom_call.1} parent=1 // pred_check_branch
      %105 = sbr.rel (0) target = $region29
    $region28: #{tpu_custom_call.1} parent=1 // pred_region
      %106 = dma.done [#allocation4], 384
    $region29: #{tpu_custom_call.1} parent=1 // pred_fallthru
      _
    %107 = vsyncpa [#allocation3], 1
    %108 = vsyncpa [#allocation6], 1
    %109 = vsyncpa [#allocation4], 1

</llo_original>
